<compile_context>
chip_gen: v5e
topology: v5e:2x2
jax: 0.10.0
libtpu: 0.0.40
codegen_flags: <defaults>
</compile_context>

<pallas_src>
import functools

import numpy as np
import jax
import jax.numpy as jnp
from jax.experimental import pallas as pl
from jax.experimental.pallas import tpu as pltpu


DTYPE_ACT = jnp.bfloat16          # inter-layer activation dtype (MXU native)


def _round_up(x, m):
    return ((x + m - 1) // m) * m


# ----------------------------------------------------------------------------
# Pallas kernel:  o[Mout, TR] = act( W[Mout, K] @ X[K, TR] + b[Mout, 1] )
# ----------------------------------------------------------------------------
def _matmul_bias_act_kernel(w_ref, b_ref, x_ref, o_ref, *, slope, apply_act):
    acc = jnp.dot(w_ref[...], x_ref[...],
                  preferred_element_type=jnp.float32)        # MXU, f32 acc
    acc = acc + b_ref[...]                                   # f32 bias add
    if apply_act:
        acc = jnp.where(acc >= 0, acc, slope * acc)          # LeakyReLU in f32
    o_ref[...] = acc.astype(o_ref.dtype)


def matmul_bias_act(w, b, x, *, slope=0.2, apply_act=True,
                    out_dtype=DTYPE_ACT, tile_r=1024):
    """w: (Mout, K) f32, b: (Mout,) f32, x: (K, R). Returns (Mout, R)."""
    Mout, K = w.shape
    R = x.shape[1]

    TR = min(tile_r, _round_up(R, 128))        # lane-dense tile (multiple of 128)
    Rp = _round_up(R, TR)
    if Rp != R:
        x = jnp.pad(x, ((0, 0), (0, Rp - R)))

    ww = w.astype(jnp.bfloat16)                # MXU inputs in bf16
    xw = x.astype(jnp.bfloat16)
    bb = b.reshape(Mout, 1).astype(jnp.float32)

    out_itemsize = np.dtype(out_dtype).itemsize
    need = (2 * K * TR * 2                     # double-buffered X tiles (bf16)
            + Mout * K * 2 + Mout * 4          # resident weights + bias
            + 2 * Mout * TR * out_itemsize)    # double-buffered output tiles
    vmem_limit = int(min(max(2 * need + (1 << 20), 4 << 20), 48 << 20))

    y = pl.pallas_call(
        functools.partial(_matmul_bias_act_kernel,
                          slope=slope, apply_act=apply_act),
        out_shape=jax.ShapeDtypeStruct((Mout, Rp), out_dtype),
        grid_spec=pltpu.PrefetchScalarGridSpec(
            num_scalar_prefetch=0,
            grid=(Rp // TR,),
            in_specs=[
                pl.BlockSpec((Mout, K), lambda r: (0, 0)),   # weights: VMEM-resident
                pl.BlockSpec((Mout, 1), lambda r: (0, 0)),   # bias:    VMEM-resident
                pl.BlockSpec((K, TR), lambda r: (0, r)),
            ],
            out_specs=pl.BlockSpec((Mout, TR), lambda r: (0, r)),
        ),
        compiler_params=pltpu.CompilerParams(
            dimension_semantics=("parallel",),               # shard R over TCs (v7x)
            vmem_limit_bytes=vmem_limit),
    )(ww, bb, xw)

    return y[:, :R] if Rp != R else y


# ----------------------------------------------------------------------------
# conv 3x3, stride 1, pad 1   (activations kept as (C, N, H, W))
# ----------------------------------------------------------------------------
def conv3x3(x, w, b, *, slope=0.2, apply_act=True, out_dtype=DTYPE_ACT):
    """x: (Cin, N, H, W); w: (3, 3, Cin, Cout) indexed [dy, dx, ci, co]; b: (Cout,)."""
    Cin, N, H, W = x.shape
    Cout = w.shape[-1]
    xp = jnp.pad(x, ((0, 0), (0, 0), (1, 1), (1, 1)))
    taps = [xp[:, :, dy:dy + H, dx:dx + W]
            for dy in range(3) for dx in range(3)]            # 9 x (Cin, N, H, W)
    x_col = jnp.concatenate(taps, axis=0).reshape(9 * Cin, N * H * W)
    w_mat = w.transpose(3, 0, 1, 2).reshape(Cout, 9 * Cin)    # rows co, cols (dy,dx,ci)
    y = matmul_bias_act(w_mat, b, x_col, slope=slope,
                        apply_act=apply_act, out_dtype=out_dtype)
    return y.reshape(Cout, N, H, W)


# ----------------------------------------------------------------------------
# transposed conv 2x2, stride 2 (packed 4*Cout output, single matmul)
# ----------------------------------------------------------------------------
def conv_transpose2x2(x, w, b, *, out_dtype=DTYPE_ACT):
    """x: (Cin, N, H, W); w: (2, 2, Cin, Cout) indexed [dy, dx, ci, co]; b: (Cout,)."""
    Cin, N, H, W = x.shape
    Cout = w.shape[-1]
    w_packed = w.transpose(0, 1, 3, 2).reshape(4 * Cout, Cin)   # rows (dy, dx, co)
    b_packed = jnp.tile(b, 4)
    y = matmul_bias_act(w_packed, b_packed, x.reshape(Cin, N * H * W),
                        apply_act=False, out_dtype=out_dtype)   # (4*Cout, R)
    y = y.reshape(2, 2, Cout, N, H, W)        # [dy, dx, co, n, i, j]
    y = y.transpose(2, 3, 4, 0, 5, 1)         # (co, n, i, dy, j, dx)
    return y.reshape(Cout, N, 2 * H, 2 * W)


# ----------------------------------------------------------------------------
# 2x2 average pooling (plain XLA reshape + mean, per review)
# ----------------------------------------------------------------------------
def avg_pool2x2(x):
    C, N, H, W = x.shape
    y = x.reshape(C, N, H // 2, 2, W // 2, 2).astype(jnp.float32)
    return y.mean(axis=(3, 5)).astype(x.dtype)


# ----------------------------------------------------------------------------
# Parameter construction (deterministic, synthetic)
# ----------------------------------------------------------------------------
def _conv_params(key, kh, kw, cin, cout):
    k1, k2 = jax.random.split(key)
    fan_in = kh * kw * cin
    w = jax.random.normal(k1, (kh, kw, cin, cout), jnp.float32) / jnp.sqrt(fan_in)
    b = 0.01 * jax.random.normal(k2, (cout,), jnp.float32)
    return w, b


def make_vdn_params(key, in_channels, wf, dep_S, dep_U):
    keys = iter(jax.random.split(key, 256))
    # ---- UNet (DNet): in_channels -> 2*in_channels ----
    unet = {"down": [], "up": []}
    prev = in_channels
    for i in range(dep_U):
        cout = (2 ** i) * wf
        w1, b1 = _conv_params(next(keys), 3, 3, prev, cout)
        w2, b2 = _conv_params(next(keys), 3, 3, cout, cout)
        unet["down"].append({"w1": w1, "b1": b1, "w2": w2, "b2": b2})
        prev = cout
    for i in reversed(range(dep_U - 1)):
        cout = (2 ** i) * wf
        wt, bt = _conv_params(next(keys), 2, 2, prev, cout)
        w1, b1 = _conv_params(next(keys), 3, 3, 2 * cout, cout)
        w2, b2 = _conv_params(next(keys), 3, 3, cout, cout)
        unet["up"].append({"wt": wt, "bt": bt, "w1": w1, "b1": b1,
                           "w2": w2, "b2": b2})
        prev = cout
    unet["last_w"], unet["last_b"] = _conv_params(next(keys), 3, 3, prev,
                                                  2 * in_channels)
    # ---- DnCNN (SNet): in_channels -> 2*in_channels ----
    nf = 64
    dn_w, dn_b = [], []
    w, b = _conv_params(next(keys), 3, 3, in_channels, nf)
    dn_w.append(w); dn_b.append(b)
    for _ in range(dep_S - 2):
        w, b = _conv_params(next(keys), 3, 3, nf, nf)
        dn_w.append(w); dn_b.append(b)
    w, b = _conv_params(next(keys), 3, 3, nf, 2 * in_channels)
    dn_w.append(w); dn_b.append(b)
    return {"unet": unet, "dncnn": {"w": dn_w, "b": dn_b}}


# ----------------------------------------------------------------------------
# Forward passes (activations stored as (C, N, H, W), bf16 between layers)
# ----------------------------------------------------------------------------
def unet_forward(p, x, slope):
    h = x.astype(DTYPE_ACT)
    blocks = []
    depth = len(p["down"])
    for i, blk in enumerate(p["down"]):
        h = conv3x3(h, blk["w1"], blk["b1"], slope=slope, apply_act=True)
        h = conv3x3(h, blk["w2"], blk["b2"], slope=slope, apply_act=True)
        if i != depth - 1:
            blocks.append(h)
            h = avg_pool2x2(h)
    for i, up in enumerate(p["up"]):
        h = conv_transpose2x2(h, up["wt"], up["bt"])
        bridge = blocks[-i - 1]            # center_crop is identity here
        h = jnp.concatenate([h, bridge], axis=0)
        h = conv3x3(h, up["w1"], up["b1"], slope=slope, apply_act=True)
        h = conv3x3(h, up["w2"], up["b2"], slope=slope, apply_act=True)
    return conv3x3(h, p["last_w"], p["last_b"], apply_act=False,
                   out_dtype=jnp.float32)


def dncnn_forward(p, x, slope):
    ws, bs = p["w"], p["b"]
    h = x.astype(DTYPE_ACT)
    h = conv3x3(h, ws[0], bs[0], slope=slope, apply_act=True)
    for i in range(1, len(ws) - 1):
        h = conv3x3(h, ws[i], bs[i], slope=slope, apply_act=True)
    return conv3x3(h, ws[-1], bs[-1], apply_act=False, out_dtype=jnp.float32)


def vdn_forward(params, x, mode="train", slope=0.2):
    """x: (N, C, H, W) like the PyTorch module; outputs are (N, 2C, H, W)."""
    xc = x.transpose(1, 0, 2, 3)           # (C, N, H, W)
    mode = mode.lower()
    if mode == "train":
        phi_z = unet_forward(params["unet"], xc, slope)
        phi_sigma = dncnn_forward(params["dncnn"], xc, slope)
        return phi_z.transpose(1, 0, 2, 3), phi_sigma.transpose(1, 0, 2, 3)
    elif mode == "test":
        return unet_forward(params["unet"], xc, slope).transpose(1, 0, 2, 3)
    elif mode == "sigma":
        return dncnn_forward(params["dncnn"], xc, slope).transpose(1, 0, 2, 3)


# ----------------------------------------------------------------------------
if __name__ == "__main__":
    # Small, module-consistent config: VDN(in_channels=4, wf=16, dep_S=5, dep_U=4)
    N, C, H, W = 2, 4, 16, 16
    WF, DEP_S, DEP_U, SLOPE = 16, 5, 4, 0.2

    root = jax.random.PRNGKey(0)
    kx, kp = jax.random.split(root)
    params = make_vdn_params(kp, C, WF, DEP_S, DEP_U)
    x = jax.random.normal(kx, (N, C, H, W), jnp.float32)   # NCHW, like PyTorch

    # --- sanity check: Pallas conv3x3 vs XLA conv (bf16-rounded inputs) ---
    wc, bc = params["dncnn"]["w"][0], params["dncnn"]["b"][0]
    y_pl = conv3x3(x.transpose(1, 0, 2, 3), wc, bc, slope=SLOPE,
                   apply_act=True, out_dtype=jnp.float32)
    x_b = x.astype(jnp.bfloat16).astype(jnp.float32)
    w_b = wc.astype(jnp.bfloat16).astype(jnp.float32)
    y_ref = jax.lax.conv_general_dilated(
        x_b, w_b, window_strides=(1, 1), padding="SAME",
        dimension_numbers=("NCHW", "HWIO", "NCHW"))
    y_ref = y_ref + bc.reshape(1, -1, 1, 1)
    y_ref = jnp.where(y_ref >= 0, y_ref, SLOPE * y_ref)
    np.testing.assert_allclose(np.asarray(y_pl.transpose(1, 0, 2, 3)),
                               np.asarray(y_ref), atol=2e-2, rtol=2e-2)

    # --- full VDN forward ---
    fwd = jax.jit(functools.partial(vdn_forward, mode="train", slope=SLOPE))
    phi_Z, phi_sigma = fwd(params, x)
    jax.block_until_ready(phi_Z)
    jax.block_until_ready(phi_sigma)

    assert phi_Z.shape == (N, 2 * C, H, W)
    assert phi_sigma.shape == (N, 2 * C, H, W)
    print("KERNEL_OK")
</pallas_src>

<mosaic_0001>
module attributes {stable_mosaic.version = 11 : i64} {
  func.func @_matmul_bias_act_kernel(%arg0: i32, %arg1: memref<64x36xbf16, #tpu.memory_space<vmem>>, %arg2: memref<64x1xf32, #tpu.memory_space<vmem>>, %arg3: memref<36x512xbf16, #tpu.memory_space<vmem>>, %arg4: memref<64x512xf32, #tpu.memory_space<vmem>>) attributes {dimension_semantics = [#tpu.dimension_semantics<parallel>], iteration_bounds = array<i64: 1>, scalar_prefetch = 0 : i64, scratch_operands = 0 : i64, tpu.core_type = #tpu.core_type<tc>, window_params = [{pipeline_mode = #tpu.pipeline_mode<synchronous>, transform_indices = @transform_0, window_bounds = array<i64: 64, 36>}, {pipeline_mode = #tpu.pipeline_mode<synchronous>, transform_indices = @transform_1, window_bounds = array<i64: 64, 1>}, {transform_indices = @transform_2, window_bounds = array<i64: 36, 512>}, {transform_indices = @transform_3, window_bounds = array<i64: 64, 512>}]} {
    %c0 = arith.constant 0 : index
    %c0_0 = arith.constant 0 : index
    %0 = vector.load %arg1[%c0, %c0_0] : memref<64x36xbf16, #tpu.memory_space<vmem>>, vector<64x36xbf16>
    %c0_1 = arith.constant 0 : index
    %c0_2 = arith.constant 0 : index
    %1 = vector.load %arg3[%c0_1, %c0_2] : memref<36x512xbf16, #tpu.memory_space<vmem>>, vector<36x512xbf16>
    %cst = arith.constant dense<0.000000e+00> : vector<64x512xf32>
    %2 = tpu.matmul %0, %1, %cst {dimension_numbers = #tpu.dot_dimension_numbers<[1], [0], [0], [1], [0, 0, 1, 1], [], []>} : vector<64x36xbf16>, vector<36x512xbf16>, vector<64x512xf32> -> vector<64x512xf32>
    %c0_3 = arith.constant 0 : index
    %c0_4 = arith.constant 0 : index
    %3 = vector.load %arg2[%c0_3, %c0_4] : memref<64x1xf32, #tpu.memory_space<vmem>>, vector<64x1xf32>
    %4 = vector.broadcast %3 : vector<64x1xf32> to vector<64x512xf32>
    %5 = arith.addf %2, %4 : vector<64x512xf32>
    %cst_5 = arith.constant 0.000000e+00 : f32
    %6 = vector.broadcast %cst_5 : f32 to vector<64x512xf32>
    %7 = arith.cmpf oge, %5, %6 : vector<64x512xf32>
    %cst_6 = arith.constant 2.000000e-01 : f32
    %8 = vector.broadcast %cst_6 : f32 to vector<64x512xf32>
    %9 = arith.mulf %8, %5 : vector<64x512xf32>
    %10 = arith.select %7, %5, %9 : vector<64x512xi1>, vector<64x512xf32>
    %c0_7 = arith.constant 0 : index
    %c0_8 = arith.constant 0 : index
    %11 = vector.load %arg4[%c0_7, %c0_8] : memref<64x512xf32, #tpu.memory_space<vmem>>, vector<64x512xf32>
    tpu.vector_store %arg4[%c0_7, %c0_8], %10 {strides = array<i32>} : memref<64x512xf32, #tpu.memory_space<vmem>>, vector<64x512xf32>,
    return
  }
  func.func @transform_0(%arg0: i32) -> (i32, i32) {
    %c0_i32 = arith.constant 0 : i32
    %c0_i32_0 = arith.constant 0 : i32
    %c0_i32_1 = arith.constant 0 : i32
    return %c0_i32, %c0_i32_0 : i32, i32
  }
  func.func @transform_1(%arg0: i32) -> (i32, i32) {
    %c0_i32 = arith.constant 0 : i32
    %c0_i32_0 = arith.constant 0 : i32
    %c0_i32_1 = arith.constant 0 : i32
    return %c0_i32, %c0_i32_0 : i32, i32
  }
  func.func @transform_2(%arg0: i32) -> (i32, i32) {
    %c0_i32 = arith.constant 0 : i32
    %c0_i32_0 = arith.constant 0 : i32
    return %c0_i32, %arg0 : i32, i32
  }
  func.func @transform_3(%arg0: i32) -> (i32, i32) {
    %c0_i32 = arith.constant 0 : i32
    %c0_i32_0 = arith.constant 0 : i32
    return %c0_i32, %arg0 : i32, i32
  }
}

</mosaic_0001>

<llo_original>
// kernel: tpu_custom_call.1
$region0: #{tpu_custom_call.1}
  #allocation0 [shape = 'u32[]', space=smem, size = 0x4, offset = 0x4, fixed_abs, tag = 'smem constant byte address 0x4 - core index']
  #allocation1 [shape = 'u32[72,128]{1,0:T(1,128)}', space=vmem, size = 0x9000, scoped, tag = 'internal scratch']
  %s0 = inlined_call_operand.vmem [shape: bf16[64,36], index: 0, kind: input, shape index: {}]
  %s1 = inlined_call_operand.vmem [shape: f32[64,1], index: 1, kind: input, shape index: {}]
  %s2 = inlined_call_operand.vmem [shape: bf16[36,512], index: 2, kind: input, shape index: {}]
  %s3 = inlined_call_operand.hbm [shape: f32[64,512], index: 3, kind: output, shape index: {}]
  %s4 = sld [smem:[#allocation0]]
  $region22: #{tpu_custom_call.1} parent=0
    _
  %s6 = ssub.s32 1, %s4
  %s7 = scalar_select 0, %s6, %s4
  $region1: #{tpu_custom_call.1} parent=0
    #allocation2 [shape = 'u8[131072]{0}', space=vmem, size = 0x20000, scoped, tag = 'output window, operand 0, single buffered']
    #allocation3 [shape = 's32[1]{0}', space=sflag, size = 0x4, scoped, tag = 'scoped memory for tpu_custom_call.1']
    %8 = vsyncpa [#allocation3], 0
    // Predicated region
    $region2: #{tpu_custom_call.1} parent=1 // pred_check
      _
    $region3: #{tpu_custom_call.1} parent=1 // pred_check_branch
      %10 = sbr.rel (0) target = $region5
    $region4: #{tpu_custom_call.1} parent=1 // pred_region
      _
    $region5: #{tpu_custom_call.1} parent=1 // pred_fallthru
      _
    // Predicated region
    $region6: #{tpu_custom_call.1} parent=1 // pred_check
      _
    $region7: #{tpu_custom_call.1} parent=1 // pred_check_branch
      %12 = sbr.rel (0) target = $region9
    $region8: #{tpu_custom_call.1} parent=1 // pred_region
      _
    $region9: #{tpu_custom_call.1} parent=1 // pred_fallthru
      _
    // Predicated region
    $region10: #{tpu_custom_call.1} parent=1 // pred_check
      _
    $region11: #{tpu_custom_call.1} parent=1 // pred_check_branch
      %14 = sbr.rel (0) target = $region13
    $region12: #{tpu_custom_call.1} parent=1 // pred_region
      _
    $region13: #{tpu_custom_call.1} parent=1 // pred_fallthru
      _
    %v16 = vld [vmem:[%s0] sm:$0xf]
    %v17 = vld [vmem:[%s0 + $0x4] sm:$0xf]
    %v18 = vld [vmem:[%s0 + $0x8] sm:$0xf]
    %v19 = vld [vmem:[%s0 + $0xc] sm:$0xf]
    %v20 = vld [vmem:[%s0 + $0x10] sm:$0xf]
    %v21 = vld [vmem:[%s0 + $0x14] sm:$0xf]
    %v22 = vld [vmem:[%s0 + $0x18] sm:$0xf]
    %v23 = vld [vmem:[%s0 + $0x1c] sm:$0xf]
    %v24 = vld [vmem:[%s2] sm:$0xff]
    %v25 = vld [vmem:[%s2 + $0x8] sm:$0xff]
    %v26 = vld [vmem:[%s2 + $0x10] sm:$0xff]
    %v27 = vld [vmem:[%s2 + $0x18] sm:$0xff]
    %v28 = vld [vmem:[%s2 + $0x20] sm:$0xff]
    %v29 = vld [vmem:[%s2 + $0x28] sm:$0xff]
    %v30 = vld [vmem:[%s2 + $0x30] sm:$0xff]
    %v31 = vld [vmem:[%s2 + $0x38] sm:$0xff]
    %v32 = vld [vmem:[%s2 + $0x40] sm:$0x33]
    %v33 = vld [vmem:[%s2 + $0x48] sm:$0x33]
    %v34 = vld [vmem:[%s1] sm:$0xff]
    %v35 = vld [vmem:[%s1 + $0x8] sm:$0xff]
    %v36 = vld [vmem:[%s1 + $0x10] sm:$0xff]
    %v37 = vld [vmem:[%s1 + $0x18] sm:$0xff]
    %v38 = vld [vmem:[%s1 + $0x20] sm:$0xff]
    %v39 = vld [vmem:[%s1 + $0x28] sm:$0xff]
    %v40 = vld [vmem:[%s1 + $0x30] sm:$0xff]
    %v41 = vld [vmem:[%s1 + $0x38] sm:$0xff]
    %43 = vset.pattern.permute.xlu0 0
    %44 = vperm.xlu0 %43, %v34
    %v45 = vpop.permute.xlu0 %44
    %48 = vset.pattern.permute.xlu0 0
    %49 = vperm.xlu0 %48, %v35
    %v50 = vpop.permute.xlu0 %49
    %53 = vset.pattern.permute.xlu0 0
    %54 = vperm.xlu0 %53, %v36
    %v55 = vpop.permute.xlu0 %54
    %58 = vset.pattern.permute.xlu0 0
    %59 = vperm.xlu0 %58, %v37
    %v60 = vpop.permute.xlu0 %59
    %63 = vset.pattern.permute.xlu0 0
    %64 = vperm.xlu0 %63, %v38
    %v65 = vpop.permute.xlu0 %64
    %68 = vset.pattern.permute.xlu0 0
    %69 = vperm.xlu0 %68, %v39
    %v70 = vpop.permute.xlu0 %69
    %73 = vset.pattern.permute.xlu0 0
    %74 = vperm.xlu0 %73, %v40
    %v75 = vpop.permute.xlu0 %74
    %78 = vset.pattern.permute.xlu0 0
    %79 = vperm.xlu0 %78, %v41
    %v80 = vpop.permute.xlu0 %79
    %v90 = vunpack.c.l.b16 %v16
    %v91 = vunpack.c.l.b16 %v17
    %v92 = vunpack.c.l.b16 %v18
    %v93 = vunpack.c.l.b16 %v19
    %v94 = vunpack.c.l.b16 %v20
    %v95 = vunpack.c.l.b16 %v21
    %v96 = vunpack.c.l.b16 %v22
    %v97 = vunpack.c.l.b16 %v23
    %v98 = vpack.c.b16 %v91, %v90
    %v99 = vpack.c.b16 %v93, %v92
    %v100 = vpack.c.b16 %v95, %v94
    %v101 = vpack.c.b16 %v97, %v96
    %v112 = vunpack.c.l.b16 %v24
    %v113 = vunpack.c.h.b16 %v24
    %v114 = vunpack.c.l.b16 %v25
    %v115 = vunpack.c.h.b16 %v25
    %v116 = vunpack.c.l.b16 %v26
    %v117 = vunpack.c.h.b16 %v26
    %v118 = vunpack.c.l.b16 %v27
    %v119 = vunpack.c.h.b16 %v27
    %v120 = vunpack.c.l.b16 %v28
    %v121 = vunpack.c.h.b16 %v28
    %v122 = vunpack.c.l.b16 %v29
    %v123 = vunpack.c.h.b16 %v29
    %v124 = vunpack.c.l.b16 %v30
    %v125 = vunpack.c.h.b16 %v30
    %v126 = vunpack.c.l.b16 %v31
    %v127 = vunpack.c.h.b16 %v31
    %v128 = vunpack.c.l.b16 %v32
    %v129 = vunpack.c.h.b16 %v32
    %v130 = vunpack.c.l.b16 %v33
    %v131 = vunpack.c.h.b16 %v33
    %v132 = vpack.c.b16 %v116, %v112
    %v133 = vpack.c.b16 %v117, %v113
    %v134 = vpack.c.b16 %v118, %v114
    %v135 = vpack.c.b16 %v119, %v115
    %v136 = vpack.c.b16 %v124, %v120
    %v137 = vpack.c.b16 %v125, %v121
    %v138 = vpack.c.b16 %v126, %v122
    %v139 = vpack.c.b16 %v127, %v123
    %v140 = vpack.c.b16 %v128, %v128
    %v141 = vpack.c.b16 %v129, %v129
    %v142 = vpack.c.b16 %v130, %v130
    %v143 = vpack.c.b16 %v131, %v131
    %vm152 = vcmask 293888
    %v154 = vsel %vm152, %v98, 0
    %v157 = vsel %vm152, %v99, 0
    %v160 = vsel %vm152, %v100, 0
    %v163 = vsel %vm152, %v101, 0
    %vm165 = vcmask 1041408
    %v167 = vsel %vm165, %v140, 0
    %v170 = vsel %vm165, %v141, 0
    %v173 = vsel %vm165, %v142, 0
    %v176 = vsel %vm165, %v143, 0
    %178 = vmatpush.bf16.msra.mxu0 0
    %179 = vmatpush.bf16.msra.mxu0 0
    %180 = vmatpush.bf16.msra.mxu0 0
    %181 = vmatpush.bf16.msra.mxu0 0
    %182 = vmatpush.bf16.msra.mxu0 0
    %183 = vmatpush.bf16.msra.mxu0 %v167
    %184 = vmatpush.bf16.msra.mxu0 %v136
    %185 = vmatpush.bf16.msra.mxu0 %v132
    %186 = vmatmul.bf16.gmra.mxu0 %v154
    %v187 = vpop.f32.mrf.mxu0
    %v188 = vadd.f32 %v45, %v187
    %v189 = vpop.f32.mrf.mxu0
    %v190 = vadd.f32 %v50, %v189
    %191 = vmatmul.bf16.gmra.mxu0 %v157
    %v192 = vpop.f32.mrf.mxu0
    %v193 = vadd.f32 %v55, %v192
    %v194 = vpop.f32.mrf.mxu0
    %v195 = vadd.f32 %v60, %v194
    %196 = vmatmul.bf16.gmra.mxu0 %v160
    %v197 = vpop.f32.mrf.mxu0
    %v198 = vadd.f32 %v65, %v197
    %v199 = vpop.f32.mrf.mxu0
    %v200 = vadd.f32 %v70, %v199
    %201 = vmatmul.bf16.gmra.mxu0 %v163
    %v202 = vpop.f32.mrf.mxu0
    %v203 = vadd.f32 %v75, %v202
    %v204 = vpop.f32.mrf.mxu0
    %v205 = vadd.f32 %v80, %v204
    %206 = vdwg.mxu0
    %207 = vmatpush.bf16.msra.mxu0 0
    %208 = vmatpush.bf16.msra.mxu0 0
    %209 = vmatpush.bf16.msra.mxu0 0
    %210 = vmatpush.bf16.msra.mxu0 0
    %211 = vmatpush.bf16.msra.mxu0 0
    %212 = vmatpush.bf16.msra.mxu0 %v170
    %213 = vmatpush.bf16.msra.mxu0 %v137
    %214 = vmatpush.bf16.msra.mxu0 %v133
    %215 = vmatmul.bf16.gmra.mxu0 %v154
    %v216 = vpop.f32.mrf.mxu0
    %v217 = vadd.f32 %v45, %v216
    %v218 = vpop.f32.mrf.mxu0
    %v219 = vadd.f32 %v50, %v218
    %220 = vmatmul.bf16.gmra.mxu0 %v157
    %v221 = vpop.f32.mrf.mxu0
    %v222 = vadd.f32 %v55, %v221
    %v223 = vpop.f32.mrf.mxu0
    %v224 = vadd.f32 %v60, %v223
    %225 = vmatmul.bf16.gmra.mxu0 %v160
    %v226 = vpop.f32.mrf.mxu0
    %v227 = vadd.f32 %v65, %v226
    %v228 = vpop.f32.mrf.mxu0
    %v229 = vadd.f32 %v70, %v228
    %230 = vmatmul.bf16.gmra.mxu0 %v163
    %v231 = vpop.f32.mrf.mxu0
    %v232 = vadd.f32 %v75, %v231
    %v233 = vpop.f32.mrf.mxu0
    %v234 = vadd.f32 %v80, %v233
    %235 = vdwg.mxu0
    %236 = vmatpush.bf16.msra.mxu0 0
    %237 = vmatpush.bf16.msra.mxu0 0
    %238 = vmatpush.bf16.msra.mxu0 0
    %239 = vmatpush.bf16.msra.mxu0 0
    %240 = vmatpush.bf16.msra.mxu0 0
    %241 = vmatpush.bf16.msra.mxu0 %v173
    %242 = vmatpush.bf16.msra.mxu0 %v138
    %243 = vmatpush.bf16.msra.mxu0 %v134
    %244 = vmatmul.bf16.gmra.mxu0 %v154
    %v245 = vpop.f32.mrf.mxu0
    %v246 = vadd.f32 %v45, %v245
    %v247 = vpop.f32.mrf.mxu0
    %v248 = vadd.f32 %v50, %v247
    %249 = vmatmul.bf16.gmra.mxu0 %v157
    %v250 = vpop.f32.mrf.mxu0
    %v251 = vadd.f32 %v55, %v250
    %v252 = vpop.f32.mrf.mxu0
    %v253 = vadd.f32 %v60, %v252
    %254 = vmatmul.bf16.gmra.mxu0 %v160
    %v255 = vpop.f32.mrf.mxu0
    %v256 = vadd.f32 %v65, %v255
    %v257 = vpop.f32.mrf.mxu0
    %v258 = vadd.f32 %v70, %v257
    %259 = vmatmul.bf16.gmra.mxu0 %v163
    %v260 = vpop.f32.mrf.mxu0
    %v261 = vadd.f32 %v75, %v260
    %v262 = vpop.f32.mrf.mxu0
    %v263 = vadd.f32 %v80, %v262
    %264 = vdwg.mxu0
    %265 = vmatpush.bf16.msra.mxu0 0
    %266 = vmatpush.bf16.msra.mxu0 0
    %267 = vmatpush.bf16.msra.mxu0 0
    %268 = vmatpush.bf16.msra.mxu0 0
    %269 = vmatpush.bf16.msra.mxu0 0
    %270 = vmatpush.bf16.msra.mxu0 %v176
    %271 = vmatpush.bf16.msra.mxu0 %v139
    %272 = vmatpush.bf16.msra.mxu0 %v135
    %273 = vmatmul.bf16.gmra.mxu0 %v154
    %v274 = vpop.f32.mrf.mxu0
    %v275 = vadd.f32 %v45, %v274
    %v276 = vpop.f32.mrf.mxu0
    %v277 = vadd.f32 %v50, %v276
    %278 = vmatmul.bf16.gmra.mxu0 %v157
    %v279 = vpop.f32.mrf.mxu0
    %v280 = vadd.f32 %v55, %v279
    %v281 = vpop.f32.mrf.mxu0
    %v282 = vadd.f32 %v60, %v281
    %283 = vmatmul.bf16.gmra.mxu0 %v160
    %v284 = vpop.f32.mrf.mxu0
    %v285 = vadd.f32 %v65, %v284
    %v286 = vpop.f32.mrf.mxu0
    %v287 = vadd.f32 %v70, %v286
    %288 = vmatmul.bf16.gmra.mxu0 %v163
    %v289 = vpop.f32.mrf.mxu0
    %v290 = vadd.f32 %v75, %v289
    %v291 = vpop.f32.mrf.mxu0
    %v292 = vadd.f32 %v80, %v291
    %293 = vdwg.mxu0
    %vm294 = vcmp.ge.f32.partialorder %v188, 0.0
    %vm295 = vcmp.ge.f32.partialorder %v217, 0.0
    %vm296 = vcmp.ge.f32.partialorder %v246, 0.0
    %vm297 = vcmp.ge.f32.partialorder %v275, 0.0
    %vm298 = vcmp.ge.f32.partialorder %v190, 0.0
    %vm299 = vcmp.ge.f32.partialorder %v219, 0.0
    %vm300 = vcmp.ge.f32.partialorder %v248, 0.0
    %vm301 = vcmp.ge.f32.partialorder %v277, 0.0
    %vm302 = vcmp.ge.f32.partialorder %v193, 0.0
    %vm303 = vcmp.ge.f32.partialorder %v222, 0.0
    %vm304 = vcmp.ge.f32.partialorder %v251, 0.0
    %vm305 = vcmp.ge.f32.partialorder %v280, 0.0
    %vm306 = vcmp.ge.f32.partialorder %v195, 0.0
    %vm307 = vcmp.ge.f32.partialorder %v224, 0.0
    %vm308 = vcmp.ge.f32.partialorder %v253, 0.0
    %vm309 = vcmp.ge.f32.partialorder %v282, 0.0
    %vm310 = vcmp.ge.f32.partialorder %v198, 0.0
    %vm311 = vcmp.ge.f32.partialorder %v227, 0.0
    %vm312 = vcmp.ge.f32.partialorder %v256, 0.0
    %vm313 = vcmp.ge.f32.partialorder %v285, 0.0
    %vm314 = vcmp.ge.f32.partialorder %v200, 0.0
    %vm315 = vcmp.ge.f32.partialorder %v229, 0.0
    %vm316 = vcmp.ge.f32.partialorder %v258, 0.0
    %vm317 = vcmp.ge.f32.partialorder %v287, 0.0
    %vm318 = vcmp.ge.f32.partialorder %v203, 0.0
    %vm319 = vcmp.ge.f32.partialorder %v232, 0.0
    %vm320 = vcmp.ge.f32.partialorder %v261, 0.0
    %vm321 = vcmp.ge.f32.partialorder %v290, 0.0
    %vm322 = vcmp.ge.f32.partialorder %v205, 0.0
    %vm323 = vcmp.ge.f32.partialorder %v234, 0.0
    %vm324 = vcmp.ge.f32.partialorder %v263, 0.0
    %vm325 = vcmp.ge.f32.partialorder %v292, 0.0
    %v326 = vmul.f32 %v188, 0.2
    %v327 = vmul.f32 %v217, 0.2
    %v328 = vmul.f32 %v246, 0.2
    %v329 = vmul.f32 %v275, 0.2
    %v330 = vmul.f32 %v190, 0.2
    %v331 = vmul.f32 %v219, 0.2
    %v332 = vmul.f32 %v248, 0.2
    %v333 = vmul.f32 %v277, 0.2
    %v334 = vmul.f32 %v193, 0.2
    %v335 = vmul.f32 %v222, 0.2
    %v336 = vmul.f32 %v251, 0.2
    %v337 = vmul.f32 %v280, 0.2
    %v338 = vmul.f32 %v195, 0.2
    %v339 = vmul.f32 %v224, 0.2
    %v340 = vmul.f32 %v253, 0.2
    %v341 = vmul.f32 %v282, 0.2
    %v342 = vmul.f32 %v198, 0.2
    %v343 = vmul.f32 %v227, 0.2
    %v344 = vmul.f32 %v256, 0.2
    %v345 = vmul.f32 %v285, 0.2
    %v346 = vmul.f32 %v200, 0.2
    %v347 = vmul.f32 %v229, 0.2
    %v348 = vmul.f32 %v258, 0.2
    %v349 = vmul.f32 %v287, 0.2
    %v350 = vmul.f32 %v203, 0.2
    %v351 = vmul.f32 %v232, 0.2
    %v352 = vmul.f32 %v261, 0.2
    %v353 = vmul.f32 %v290, 0.2
    %v354 = vmul.f32 %v205, 0.2
    %v355 = vmul.f32 %v234, 0.2
    %v356 = vmul.f32 %v263, 0.2
    %v357 = vmul.f32 %v292, 0.2
    %v358 = vsel %vm294, %v188, %v326
    %v359 = vsel %vm295, %v217, %v327
    %v360 = vsel %vm296, %v246, %v328
    %v361 = vsel %vm297, %v275, %v329
    %v362 = vsel %vm298, %v190, %v330
    %v363 = vsel %vm299, %v219, %v331
    %v364 = vsel %vm300, %v248, %v332
    %v365 = vsel %vm301, %v277, %v333
    %v366 = vsel %vm302, %v193, %v334
    %v367 = vsel %vm303, %v222, %v335
    %v368 = vsel %vm304, %v251, %v336
    %v369 = vsel %vm305, %v280, %v337
    %v370 = vsel %vm306, %v195, %v338
    %v371 = vsel %vm307, %v224, %v339
    %v372 = vsel %vm308, %v253, %v340
    %v373 = vsel %vm309, %v282, %v341
    %v374 = vsel %vm310, %v198, %v342
    %v375 = vsel %vm311, %v227, %v343
    %v376 = vsel %vm312, %v256, %v344
    %v377 = vsel %vm313, %v285, %v345
    %v378 = vsel %vm314, %v200, %v346
    %v379 = vsel %vm315, %v229, %v347
    %v380 = vsel %vm316, %v258, %v348
    %v381 = vsel %vm317, %v287, %v349
    %v382 = vsel %vm318, %v203, %v350
    %v383 = vsel %vm319, %v232, %v351
    %v384 = vsel %vm320, %v261, %v352
    %v385 = vsel %vm321, %v290, %v353
    %v386 = vsel %vm322, %v205, %v354
    %v387 = vsel %vm323, %v234, %v355
    %v388 = vsel %vm324, %v263, %v356
    %v389 = vsel %vm325, %v292, %v357
    %390 = vst [vmem:[#allocation2] sm:$0xff] %v358
    %391 = vst [vmem:[#allocation2 + $0x8] sm:$0xff] %v359
    %392 = vst [vmem:[#allocation2 + $0x10] sm:$0xff] %v360
    %393 = vst [vmem:[#allocation2 + $0x18] sm:$0xff] %v361
    %394 = vst [vmem:[#allocation2 + $0x20] sm:$0xff] %v362
    %395 = vst [vmem:[#allocation2 + $0x28] sm:$0xff] %v363
    %396 = vst [vmem:[#allocation2 + $0x30] sm:$0xff] %v364
    %397 = vst [vmem:[#allocation2 + $0x38] sm:$0xff] %v365
    %398 = vst [vmem:[#allocation2 + $0x40] sm:$0xff] %v366
    %399 = vst [vmem:[#allocation2 + $0x48] sm:$0xff] %v367
    %400 = vst [vmem:[#allocation2 + $0x50] sm:$0xff] %v368
    %401 = vst [vmem:[#allocation2 + $0x58] sm:$0xff] %v369
    %402 = vst [vmem:[#allocation2 + $0x60] sm:$0xff] %v370
    %403 = vst [vmem:[#allocation2 + $0x68] sm:$0xff] %v371
    %404 = vst [vmem:[#allocation2 + $0x70] sm:$0xff] %v372
    %405 = vst [vmem:[#allocation2 + $0x78] sm:$0xff] %v373
    %406 = vst [vmem:[#allocation2 + $0x80] sm:$0xff] %v374
    %407 = vst [vmem:[#allocation2 + $0x88] sm:$0xff] %v375
    %408 = vst [vmem:[#allocation2 + $0x90] sm:$0xff] %v376
    %409 = vst [vmem:[#allocation2 + $0x98] sm:$0xff] %v377
    %410 = vst [vmem:[#allocation2 + $0xa0] sm:$0xff] %v378
    %411 = vst [vmem:[#allocation2 + $0xa8] sm:$0xff] %v379
    %412 = vst [vmem:[#allocation2 + $0xb0] sm:$0xff] %v380
    %413 = vst [vmem:[#allocation2 + $0xb8] sm:$0xff] %v381
    %414 = vst [vmem:[#allocation2 + $0xc0] sm:$0xff] %v382
    %415 = vst [vmem:[#allocation2 + $0xc8] sm:$0xff] %v383
    %416 = vst [vmem:[#allocation2 + $0xd0] sm:$0xff] %v384
    %417 = vst [vmem:[#allocation2 + $0xd8] sm:$0xff] %v385
    %418 = vst [vmem:[#allocation2 + $0xe0] sm:$0xff] %v386
    %419 = vst [vmem:[#allocation2 + $0xe8] sm:$0xff] %v387
    %420 = vst [vmem:[#allocation2 + $0xf0] sm:$0xff] %v388
    %421 = vst [vmem:[#allocation2 + $0xf8] sm:$0xff] %v389
    // Predicated region
    $region14: #{tpu_custom_call.1} parent=1 // pred_check
      _
    $region15: #{tpu_custom_call.1} parent=1 // pred_check_branch
      %423 = sbr.rel (0) target = $region17
    $region16: #{tpu_custom_call.1} parent=1 // pred_region
      %425 = vsyncadd [#allocation3], 0
      %s426 = sshll.u32 [#allocation2], 4
      %s427 = int_to_ptr.vmem [resolvable:$true] %s426
      %s428 = sshll.u32 %s3, 4
      %s429 = int_to_ptr.hbm [resolvable:$true] %s428
      %434 = dma.vmem_to_hbm [thread:$0]  %s427, 4096, %s429, [#allocation3], 512, 512, 32
    $region17: #{tpu_custom_call.1} parent=1 // pred_fallthru
      _
    // Predicated region
    $region18: #{tpu_custom_call.1} parent=1 // pred_check
      _
    $region19: #{tpu_custom_call.1} parent=1 // pred_check_branch
      %436 = sbr.rel (0) target = $region21
    $region20: #{tpu_custom_call.1} parent=1 // pred_region
      %438 = dma.done [#allocation3], 4096
    $region21: #{tpu_custom_call.1} parent=1 // pred_fallthru
      _
    %439 = vsyncpa [#allocation3], 1

</llo_original>
